<compile_context>
chip_gen: v7x
topology: tpu7x:2x2x1
jax: 0.10.0
libtpu: 0.0.40
codegen_flags: <defaults>
</compile_context>

<pallas_src>
import functools

import jax
import jax.numpy as jnp
from jax.experimental import pallas as pl
from jax.experimental.pallas import tpu as pltpu


# ---------------------------------------------------------------------------
# Kernel
# ---------------------------------------------------------------------------
def _mixing_kernel(num_agents, hidden, compute_dtype,
                   q_ref, x_ref, wa_ref, ba_ref, wb_ref, bb_ref, out_ref):
    N, H = num_agents, hidden

    x = x_ref[...].astype(compute_dtype)            # (TB, S)
    q = q_ref[...]                                  # (TB, N)  f32

    # ---- fused first layers of the 4 hyper-MLPs: one (TB,S)x(S,4H) matmul --
    h_all = jnp.dot(x, wa_ref[...].astype(compute_dtype),
                    preferred_element_type=jnp.float32) + ba_ref[...]
    h_all = jnp.maximum(h_all, 0.0)                 # ReLU, f32
    h1 = h_all[:, 0 * H:1 * H].astype(compute_dtype)
    h2 = h_all[:, 1 * H:2 * H].astype(compute_dtype)
    hb1 = h_all[:, 2 * H:3 * H].astype(compute_dtype)
    hb2 = h_all[:, 3 * H:4 * H]                     # stays f32 (VPU path)

    # packed second-layer lane offsets
    o2 = N * H          # end of hyper_net1 weights / biases
    o3 = o2 + H         # end of hyper_net2
    o4 = o3 + H         # end of hyper_net_b1
    o5 = o4 + H         # end of hyper_net_b2 weight row (in bb only)

    # ---- hyper_net1 second layer, all agents fused: (TB, N*H) --------------
    w1_abs = jnp.abs(
        jnp.dot(h1, wb_ref[:, 0:o2].astype(compute_dtype),
                preferred_element_type=jnp.float32) + bb_ref[:, 0:o2])
    # ---- hyper_net2 second layer: (TB, H) ----------------------------------
    w2 = jnp.abs(
        jnp.dot(h2, wb_ref[:, o2:o3].astype(compute_dtype),
                preferred_element_type=jnp.float32) + bb_ref[:, o2:o3])
    # ---- hyper_net_b1 second layer: (TB, H) --------------------------------
    b1 = jnp.dot(hb1, wb_ref[:, o3:o4].astype(compute_dtype),
                 preferred_element_type=jnp.float32) + bb_ref[:, o3:o4]
    # ---- hyper_net_b2 second layer on the VPU (output width 1) -------------
    b2 = jnp.sum(hb2 * bb_ref[:, o4:o5], axis=-1, keepdims=True) \
        + bb_ref[:, o5:o5 + 1]                      # (TB, 1)

    # ---- bmm(q_vals, weights1) + b1 : sum of the N H-lane slabs (VPU) ------
    mixed = b1
    for n in range(N):
        mixed = mixed + q[:, n:n + 1] * w1_abs[:, n * H:(n + 1) * H]

    # ---- bmm(mixed, weights2) + b2 : per-row contraction -------------------
    q_tot = jnp.sum(mixed * w2, axis=-1, keepdims=True) + b2
    out_ref[...] = q_tot.astype(out_ref.dtype)


# ---------------------------------------------------------------------------
# Wrapper
# ---------------------------------------------------------------------------
def _round_up(x, m):
    return ((x + m - 1) // m) * m


def mixing_net_forward(q_vals, inputs, params, *, num_agents, hidden=64,
                       tile_b=None, compute_dtype=jnp.float32):
    """q_vals: (B, N) f32, inputs: (B, S) f32 -> q_tot (B, 1, 1) f32."""
    B, N = q_vals.shape
    _, S = inputs.shape
    assert N == num_agents
    H = hidden

    # Batch tile: biggest sensible tile (multiple of 8, capped at 256 rows).
    if tile_b is None:
        tile_b = min(_round_up(max(B, 1), 8), 256)
    assert tile_b % 8 == 0

    n_tiles = pl.cdiv(B, tile_b)
    B_pad = n_tiles * tile_b
    if B_pad != B:
        q_vals = jnp.pad(q_vals, ((0, B_pad - B), (0, 0)))
        inputs = jnp.pad(inputs, ((0, B_pad - B), (0, 0)))

    # ---- pack 16 parameter tensors into 4 operands --------------------------
    # wa : (S, 4H)   fused first-layer weights  [net1 | net2 | net_b1 | net_b2]
    # ba : (1, 4H)   fused first-layer biases
    # wb : (H, N*H + 2H)  [net1 2nd W | net2 2nd W | net_b1 2nd W]
    # bb : (1, N*H + 3H + 1)
    #      [net1 2nd b | net2 2nd b | net_b1 2nd b | net_b2 2nd W^T | net_b2 2nd b]
    wa = jnp.concatenate([params['h1a_w'], params['h2a_w'],
                          params['hb1a_w'], params['hb2a_w']], axis=1)
    ba = jnp.concatenate([params['h1a_b'], params['h2a_b'],
                          params['hb1a_b'], params['hb2a_b']], axis=1)
    wb = jnp.concatenate([params['h1b_w'], params['h2b_w'],
                          params['hb1b_w']], axis=1)
    bb = jnp.concatenate([params['h1b_b'], params['h2b_b'], params['hb1b_b'],
                          params['hb2b_w'].T, params['hb2b_b']], axis=1)

    kernel = functools.partial(_mixing_kernel, num_agents, H, compute_dtype)

    def rep(shape):  # replicated (broadcast) parameter block
        return pl.BlockSpec(shape, lambda i: (0, 0))

    out = pl.pallas_call(
        kernel,
        out_shape=jax.ShapeDtypeStruct((B_pad, 1), jnp.float32),
        grid=(n_tiles,),
        in_specs=[
            pl.BlockSpec((tile_b, N), lambda i: (i, 0)),   # q_vals
            pl.BlockSpec((tile_b, S), lambda i: (i, 0)),   # inputs (state)
            rep(wa.shape), rep(ba.shape), rep(wb.shape), rep(bb.shape),
        ],
        out_specs=pl.BlockSpec((tile_b, 1), lambda i: (i, 0)),
        compiler_params=pltpu.CompilerParams(
            dimension_semantics=("parallel",)),
    )(q_vals, inputs, wa, ba, wb, bb)

    return out[:B].reshape(B, 1, 1)


# ---------------------------------------------------------------------------
# Deterministic parameter construction (torch nn.Linear default-style init)
# ---------------------------------------------------------------------------
def make_params(key, input_size, num_agents, hidden=64):
    def linear(key, fan_in, fan_out):
        kw, kb = jax.random.split(key)
        bound = 1.0 / (fan_in ** 0.5)
        w = jax.random.uniform(kw, (fan_in, fan_out), jnp.float32, -bound, bound)
        b = jax.random.uniform(kb, (1, fan_out), jnp.float32, -bound, bound)
        return w, b

    keys = jax.random.split(key, 8)
    p = {}
    # hyper_net1: Linear(S,64) -> ReLU -> Linear(64, N*64)
    p['h1a_w'], p['h1a_b'] = linear(keys[0], input_size, hidden)
    p['h1b_w'], p['h1b_b'] = linear(keys[1], hidden, num_agents * hidden)
    # hyper_net2: Linear(S,64) -> ReLU -> Linear(64, 64*1)
    p['h2a_w'], p['h2a_b'] = linear(keys[2], input_size, hidden)
    p['h2b_w'], p['h2b_b'] = linear(keys[3], hidden, hidden)
    # hyper_net_b1: Linear(S,64) -> ReLU -> Linear(64, 64)
    p['hb1a_w'], p['hb1a_b'] = linear(keys[4], input_size, hidden)
    p['hb1b_w'], p['hb1b_b'] = linear(keys[5], hidden, hidden)
    # hyper_net_b2: Linear(S,64) -> ReLU -> Linear(64, 1)
    p['hb2a_w'], p['hb2a_b'] = linear(keys[6], input_size, hidden)
    p['hb2b_w'], p['hb2b_b'] = linear(keys[7], hidden, 1)
    return p


# ---------------------------------------------------------------------------
# Pure-JAX reference (mirrors the torch forward exactly)
# ---------------------------------------------------------------------------
def mixing_net_reference(q_vals, inputs, params, *, num_agents, hidden=64):
    p = params
    B = inputs.shape[0]

    def mlp(x, w1, b1, w2, b2):
        return jnp.maximum(x @ w1 + b1, 0.0) @ w2 + b2

    w1 = jnp.abs(mlp(inputs, p['h1a_w'], p['h1a_b'], p['h1b_w'], p['h1b_b'])
                 ).reshape(B, num_agents, hidden)
    w2 = jnp.abs(mlp(inputs, p['h2a_w'], p['h2a_b'], p['h2b_w'], p['h2b_b'])
                 ).reshape(B, hidden, 1)
    b1 = mlp(inputs, p['hb1a_w'], p['hb1a_b'], p['hb1b_w'], p['hb1b_b']
             ).reshape(B, 1, hidden)
    b2 = mlp(inputs, p['hb2a_w'], p['hb2a_b'], p['hb2b_w'], p['hb2b_b']
             ).reshape(B, 1, 1)
    q = q_vals.reshape(B, 1, num_agents)
    return jnp.matmul(jnp.matmul(q, w1) + b1, w2) + b2


# ---------------------------------------------------------------------------
if __name__ == "__main__":
    NUM_AGENTS, INPUT_SIZE = 4, 32

    key = jax.random.PRNGKey(0)
    params = make_params(jax.random.fold_in(key, 0), INPUT_SIZE, NUM_AGENTS)

    # B=8 hits the single-tile path; B=10 exercises the batch-padding path.
    for B in (8, 10):
        kq, kx = jax.random.split(jax.random.fold_in(key, B))
        q_vals = jax.random.normal(kq, (B, NUM_AGENTS), jnp.float32)
        inputs = jax.random.normal(kx, (B, INPUT_SIZE), jnp.float32)

        q_tot = mixing_net_forward(q_vals, inputs, params, num_agents=NUM_AGENTS)
        q_tot = jax.block_until_ready(q_tot)

        q_ref = mixing_net_reference(q_vals, inputs, params, num_agents=NUM_AGENTS)
        assert q_tot.shape == (B, 1, 1)
        assert jnp.allclose(q_tot, q_ref, atol=1e-4, rtol=1e-4), (B, q_tot, q_ref)

    print("KERNEL_OK")
</pallas_src>

<mosaic_0001>
module attributes {stable_mosaic.version = 11 : i64} {
  func.func @_mixing_kernel(%arg0: i32, %arg1: memref<8x4xf32, #tpu.memory_space<vmem>>, %arg2: memref<8x32xf32, #tpu.memory_space<vmem>>, %arg3: memref<32x256xf32, #tpu.memory_space<vmem>>, %arg4: memref<1x256xf32, #tpu.memory_space<vmem>>, %arg5: memref<64x384xf32, #tpu.memory_space<vmem>>, %arg6: memref<1x449xf32, #tpu.memory_space<vmem>>, %arg7: memref<8x1xf32, #tpu.memory_space<vmem>>) attributes {dimension_semantics = [#tpu.dimension_semantics<parallel>], iteration_bounds = array<i64: 1>, scalar_prefetch = 0 : i64, scratch_operands = 0 : i64, tpu.core_type = #tpu.core_type<tc>, window_params = [{transform_indices = @transform_0, window_bounds = array<i64: 8, 4>}, {transform_indices = @transform_1, window_bounds = array<i64: 8, 32>}, {pipeline_mode = #tpu.pipeline_mode<synchronous>, transform_indices = @transform_2, window_bounds = array<i64: 32, 256>}, {pipeline_mode = #tpu.pipeline_mode<synchronous>, transform_indices = @transform_3, window_bounds = array<i64: 1, 256>}, {pipeline_mode = #tpu.pipeline_mode<synchronous>, transform_indices = @transform_4, window_bounds = array<i64: 64, 384>}, {pipeline_mode = #tpu.pipeline_mode<synchronous>, transform_indices = @transform_5, window_bounds = array<i64: 1, 449>}, {transform_indices = @transform_6, window_bounds = array<i64: 8, 1>}]} {
    %c0 = arith.constant 0 : index
    %c0_0 = arith.constant 0 : index
    %0 = vector.load %arg2[%c0, %c0_0] : memref<8x32xf32, #tpu.memory_space<vmem>>, vector<8x32xf32>
    %c0_1 = arith.constant 0 : index
    %c0_2 = arith.constant 0 : index
    %1 = vector.load %arg1[%c0_1, %c0_2] : memref<8x4xf32, #tpu.memory_space<vmem>>, vector<8x4xf32>
    %c0_3 = arith.constant 0 : index
    %c0_4 = arith.constant 0 : index
    %2 = vector.load %arg3[%c0_3, %c0_4] : memref<32x256xf32, #tpu.memory_space<vmem>>, vector<32x256xf32>
    %cst = arith.constant dense<0.000000e+00> : vector<8x256xf32>
    %3 = tpu.matmul %0, %2, %cst {dimension_numbers = #tpu.dot_dimension_numbers<[1], [0], [0], [1], [0, 0, 1, 1], [], []>} : vector<8x32xf32>, vector<32x256xf32>, vector<8x256xf32> -> vector<8x256xf32>
    %c0_5 = arith.constant 0 : index
    %c0_6 = arith.constant 0 : index
    %4 = vector.load %arg4[%c0_5, %c0_6] : memref<1x256xf32, #tpu.memory_space<vmem>>, vector<1x256xf32>
    %5 = vector.broadcast %4 : vector<1x256xf32> to vector<8x256xf32>
    %6 = arith.addf %3, %5 : vector<8x256xf32>
    %cst_7 = arith.constant 0.000000e+00 : f32
    %7 = vector.broadcast %cst_7 : f32 to vector<8x256xf32>
    %8 = arith.maximumf %6, %7 : vector<8x256xf32>
    %9 = vector.extract_strided_slice %8 {offsets = [0, 0], sizes = [8, 64], strides = [1, 1]} : vector<8x256xf32> to vector<8x64xf32>
    %10 = vector.extract_strided_slice %8 {offsets = [0, 64], sizes = [8, 64], strides = [1, 1]} : vector<8x256xf32> to vector<8x64xf32>
    %11 = vector.extract_strided_slice %8 {offsets = [0, 128], sizes = [8, 64], strides = [1, 1]} : vector<8x256xf32> to vector<8x64xf32>
    %12 = vector.extract_strided_slice %8 {offsets = [0, 192], sizes = [8, 64], strides = [1, 1]} : vector<8x256xf32> to vector<8x64xf32>
    %c0_8 = arith.constant 0 : index
    %c0_9 = arith.constant 0 : index
    %13 = vector.load %arg5[%c0_8, %c0_9] : memref<64x384xf32, #tpu.memory_space<vmem>>, vector<64x256xf32>
    %cst_10 = arith.constant dense<0.000000e+00> : vector<8x256xf32>
    %14 = tpu.matmul %9, %13, %cst_10 {dimension_numbers = #tpu.dot_dimension_numbers<[1], [0], [0], [1], [0, 0, 1, 1], [], []>} : vector<8x64xf32>, vector<64x256xf32>, vector<8x256xf32> -> vector<8x256xf32>
    %c0_11 = arith.constant 0 : index
    %c0_12 = arith.constant 0 : index
    %15 = vector.load %arg6[%c0_11, %c0_12] : memref<1x449xf32, #tpu.memory_space<vmem>>, vector<1x256xf32>
    %16 = vector.broadcast %15 : vector<1x256xf32> to vector<8x256xf32>
    %17 = arith.addf %14, %16 : vector<8x256xf32>
    %18 = math.absf %17 : vector<8x256xf32>
    %c0_13 = arith.constant 0 : index
    %c256 = arith.constant 256 : index
    %19 = vector.load %arg5[%c0_13, %c256] : memref<64x384xf32, #tpu.memory_space<vmem>>, vector<64x64xf32>
    %cst_14 = arith.constant dense<0.000000e+00> : vector<8x64xf32>
    %20 = tpu.matmul %10, %19, %cst_14 {dimension_numbers = #tpu.dot_dimension_numbers<[1], [0], [0], [1], [0, 0, 1, 1], [], []>} : vector<8x64xf32>, vector<64x64xf32>, vector<8x64xf32> -> vector<8x64xf32>
    %c0_15 = arith.constant 0 : index
    %c256_16 = arith.constant 256 : index
    %21 = vector.load %arg6[%c0_15, %c256_16] : memref<1x449xf32, #tpu.memory_space<vmem>>, vector<1x64xf32>
    %22 = vector.broadcast %21 : vector<1x64xf32> to vector<8x64xf32>
    %23 = arith.addf %20, %22 : vector<8x64xf32>
    %24 = math.absf %23 : vector<8x64xf32>
    %c0_17 = arith.constant 0 : index
    %c320 = arith.constant 320 : index
    %25 = vector.load %arg5[%c0_17, %c320] : memref<64x384xf32, #tpu.memory_space<vmem>>, vector<64x64xf32>
    %cst_18 = arith.constant dense<0.000000e+00> : vector<8x64xf32>
    %26 = tpu.matmul %11, %25, %cst_18 {dimension_numbers = #tpu.dot_dimension_numbers<[1], [0], [0], [1], [0, 0, 1, 1], [], []>} : vector<8x64xf32>, vector<64x64xf32>, vector<8x64xf32> -> vector<8x64xf32>
    %c0_19 = arith.constant 0 : index
    %c320_20 = arith.constant 320 : index
    %27 = vector.load %arg6[%c0_19, %c320_20] : memref<1x449xf32, #tpu.memory_space<vmem>>, vector<1x64xf32>
    %28 = vector.broadcast %27 : vector<1x64xf32> to vector<8x64xf32>
    %29 = arith.addf %26, %28 : vector<8x64xf32>
    %c0_21 = arith.constant 0 : index
    %c384 = arith.constant 384 : index
    %30 = vector.load %arg6[%c0_21, %c384] : memref<1x449xf32, #tpu.memory_space<vmem>>, vector<1x64xf32>
    %31 = vector.broadcast %30 : vector<1x64xf32> to vector<8x64xf32>
    %32 = arith.mulf %12, %31 : vector<8x64xf32>
    %cst_22 = arith.constant dense<0.000000e+00> : vector<8xf32>
    %33 = vector.multi_reduction <add>, %32, %cst_22 [1] : vector<8x64xf32> to vector<8xf32>
    %34 = vector.shape_cast %33 : vector<8xf32> to vector<8x1xf32>
    %c0_23 = arith.constant 0 : index
    %c448 = arith.constant 448 : index
    %35 = vector.load %arg6[%c0_23, %c448] : memref<1x449xf32, #tpu.memory_space<vmem>>, vector<1x1xf32>
    %36 = vector.broadcast %35 : vector<1x1xf32> to vector<8x1xf32>
    %37 = arith.addf %34, %36 : vector<8x1xf32>
    %38 = vector.extract_strided_slice %1 {offsets = [0, 0], sizes = [8, 1], strides = [1, 1]} : vector<8x4xf32> to vector<8x1xf32>
    %39 = vector.extract_strided_slice %18 {offsets = [0, 0], sizes = [8, 64], strides = [1, 1]} : vector<8x256xf32> to vector<8x64xf32>
    %40 = vector.broadcast %38 : vector<8x1xf32> to vector<8x64xf32>
    %41 = arith.mulf %40, %39 : vector<8x64xf32>
    %42 = arith.addf %29, %41 : vector<8x64xf32>
    %43 = vector.extract_strided_slice %1 {offsets = [0, 1], sizes = [8, 1], strides = [1, 1]} : vector<8x4xf32> to vector<8x1xf32>
    %44 = vector.extract_strided_slice %18 {offsets = [0, 64], sizes = [8, 64], strides = [1, 1]} : vector<8x256xf32> to vector<8x64xf32>
    %45 = vector.broadcast %43 : vector<8x1xf32> to vector<8x64xf32>
    %46 = arith.mulf %45, %44 : vector<8x64xf32>
    %47 = arith.addf %42, %46 : vector<8x64xf32>
    %48 = vector.extract_strided_slice %1 {offsets = [0, 2], sizes = [8, 1], strides = [1, 1]} : vector<8x4xf32> to vector<8x1xf32>
    %49 = vector.extract_strided_slice %18 {offsets = [0, 128], sizes = [8, 64], strides = [1, 1]} : vector<8x256xf32> to vector<8x64xf32>
    %50 = vector.broadcast %48 : vector<8x1xf32> to vector<8x64xf32>
    %51 = arith.mulf %50, %49 : vector<8x64xf32>
    %52 = arith.addf %47, %51 : vector<8x64xf32>
    %53 = vector.extract_strided_slice %1 {offsets = [0, 3], sizes = [8, 1], strides = [1, 1]} : vector<8x4xf32> to vector<8x1xf32>
    %54 = vector.extract_strided_slice %18 {offsets = [0, 192], sizes = [8, 64], strides = [1, 1]} : vector<8x256xf32> to vector<8x64xf32>
    %55 = vector.broadcast %53 : vector<8x1xf32> to vector<8x64xf32>
    %56 = arith.mulf %55, %54 : vector<8x64xf32>
    %57 = arith.addf %52, %56 : vector<8x64xf32>
    %58 = arith.mulf %57, %24 : vector<8x64xf32>
    %cst_24 = arith.constant dense<0.000000e+00> : vector<8xf32>
    %59 = vector.multi_reduction <add>, %58, %cst_24 [1] : vector<8x64xf32> to vector<8xf32>
    %60 = vector.shape_cast %59 : vector<8xf32> to vector<8x1xf32>
    %61 = arith.addf %60, %37 : vector<8x1xf32>
    %c0_25 = arith.constant 0 : index
    %c0_26 = arith.constant 0 : index
    %62 = vector.load %arg7[%c0_25, %c0_26] : memref<8x1xf32, #tpu.memory_space<vmem>>, vector<8x1xf32>
    tpu.vector_store %arg7[%c0_25, %c0_26], %61 {strides = array<i32>} : memref<8x1xf32, #tpu.memory_space<vmem>>, vector<8x1xf32>,
    return
  }
  func.func @transform_0(%arg0: i32) -> (i32, i32) {
    %c0_i32 = arith.constant 0 : i32
    %c0_i32_0 = arith.constant 0 : i32
    return %arg0, %c0_i32 : i32, i32
  }
  func.func @transform_1(%arg0: i32) -> (i32, i32) {
    %c0_i32 = arith.constant 0 : i32
    %c0_i32_0 = arith.constant 0 : i32
    return %arg0, %c0_i32 : i32, i32
  }
  func.func @transform_2(%arg0: i32) -> (i32, i32) {
    %c0_i32 = arith.constant 0 : i32
    %c0_i32_0 = arith.constant 0 : i32
    %c0_i32_1 = arith.constant 0 : i32
    return %c0_i32, %c0_i32_0 : i32, i32
  }
  func.func @transform_3(%arg0: i32) -> (i32, i32) {
    %c0_i32 = arith.constant 0 : i32
    %c0_i32_0 = arith.constant 0 : i32
    %c0_i32_1 = arith.constant 0 : i32
    return %c0_i32, %c0_i32_0 : i32, i32
  }
  func.func @transform_4(%arg0: i32) -> (i32, i32) {
    %c0_i32 = arith.constant 0 : i32
    %c0_i32_0 = arith.constant 0 : i32
    %c0_i32_1 = arith.constant 0 : i32
    return %c0_i32, %c0_i32_0 : i32, i32
  }
  func.func @transform_5(%arg0: i32) -> (i32, i32) {
    %c0_i32 = arith.constant 0 : i32
    %c0_i32_0 = arith.constant 0 : i32
    %c0_i32_1 = arith.constant 0 : i32
    return %c0_i32, %c0_i32_0 : i32, i32
  }
  func.func @transform_6(%arg0: i32) -> (i32, i32) {
    %c0_i32 = arith.constant 0 : i32
    %c0_i32_0 = arith.constant 0 : i32
    return %arg0, %c0_i32 : i32, i32
  }
}

</mosaic_0001>

<llo_original>
// kernel: tpu_custom_call.1
$region0: #{tpu_custom_call.1}
  #allocation0 [shape = 'u32[]', space=smem, size = 0x4, offset = 0x4, fixed_abs, tag = 'smem constant byte address 0x4 - core index']
  #allocation1 [shape = 'u32[144,128]{1,0:T(1,128)}', space=vmem, size = 0x12000, scoped, tag = 'internal scratch']
  %s0 = inlined_call_operand.vmem [shape: f32[8,4], index: 0, kind: input, shape index: {}]
  %s1 = inlined_call_operand.vmem [shape: f32[8,32], index: 1, kind: input, shape index: {}]
  %s2 = inlined_call_operand.hbm [shape: f32[32,256], index: 2, kind: input, shape index: {}]
  %s3 = inlined_call_operand.vmem [shape: f32[1,256], index: 3, kind: input, shape index: {}]
  %s4 = inlined_call_operand.hbm [shape: f32[64,384], index: 4, kind: input, shape index: {}]
  %s5 = inlined_call_operand.vmem [shape: f32[1,449], index: 5, kind: input, shape index: {}]
  %s6 = inlined_call_operand.vmem [shape: f32[8,1], index: 6, kind: output, shape index: {}]
  %s7 = sld [smem:[#allocation0]]
  $region42: #{tpu_custom_call.1} parent=0
    _
  %s9 = ssub.s32 1, %s7
  %s10 = scalar_select 0, %s9, %s7
  $region1: #{tpu_custom_call.1} parent=0
    #allocation2 [shape = 'u8[32768]{0}', space=vmem, size = 0x8000, scoped, tag = 'input window, operand 2, single buffered']
    #allocation3 [shape = 's32[1]{0}', space=sflag, size = 0x4, scoped, tag = 'scoped memory for tpu_custom_call.1']
    #allocation4 [shape = 'u8[98304]{0}', space=vmem, size = 0x18000, scoped, tag = 'input window, operand 4, single buffered']
    #allocation5 [shape = 's32[1]{0}', space=sflag, size = 0x4, scoped, tag = 'scoped memory for tpu_custom_call.1']
    %11 = vsyncpa [#allocation3], 0
    %12 = vsyncpa [#allocation5], 0
    // Predicated region
    $region2: #{tpu_custom_call.1} parent=1 // pred_check
      _
    $region3: #{tpu_custom_call.1} parent=1 // pred_check_branch
      %14 = sbr.rel (0) target = $region5
    $region4: #{tpu_custom_call.1} parent=1 // pred_region
      _
    $region5: #{tpu_custom_call.1} parent=1 // pred_fallthru
      _
    // Predicated region
    $region6: #{tpu_custom_call.1} parent=1 // pred_check
      _
    $region7: #{tpu_custom_call.1} parent=1 // pred_check_branch
      %16 = sbr.rel (0) target = $region9
    $region8: #{tpu_custom_call.1} parent=1 // pred_region
      _
    $region9: #{tpu_custom_call.1} parent=1 // pred_fallthru
      _
    // Predicated region
    $region10: #{tpu_custom_call.1} parent=1 // pred_check
      _
    $region11: #{tpu_custom_call.1} parent=1 // pred_check_branch
      %18 = sbr.rel (0) target = $region13
    $region12: #{tpu_custom_call.1} parent=1 // pred_region
      %s20 = ssub.s32 1024, 1024
      %21 = vsyncadd [#allocation3], %s20
      %s22 = sshll.u32 [#allocation2], 4
      %s23 = int_to_ptr.vmem [resolvable:$true] %s22
      %28 = dma.hbm_to_vmem [thread:$0]  %s2, 1024, %s23, [#allocation3], 256, 256, 16
    $region13: #{tpu_custom_call.1} parent=1 // pred_fallthru
      _
    // Predicated region
    $region14: #{tpu_custom_call.1} parent=1 // pred_check
      _
    $region15: #{tpu_custom_call.1} parent=1 // pred_check_branch
      %30 = sbr.rel (0) target = $region17
    $region16: #{tpu_custom_call.1} parent=1 // pred_region
      _
    $region17: #{tpu_custom_call.1} parent=1 // pred_fallthru
      _
    // Predicated region
    $region18: #{tpu_custom_call.1} parent=1 // pred_check
      _
    $region19: #{tpu_custom_call.1} parent=1 // pred_check_branch
      %32 = sbr.rel (0) target = $region21
    $region20: #{tpu_custom_call.1} parent=1 // pred_region
      %s34 = ssub.s32 3072, 3072
      %35 = vsyncadd [#allocation5], %s34
      %s36 = sshll.u32 [#allocation4], 4
      %s37 = int_to_ptr.vmem [resolvable:$true] %s36
      %42 = dma.hbm_to_vmem [thread:$0]  %s4, 3072, %s37, [#allocation5], 384, 384, 24
    $region21: #{tpu_custom_call.1} parent=1 // pred_fallthru
      _
    // Predicated region
    $region22: #{tpu_custom_call.1} parent=1 // pred_check
      _
    $region23: #{tpu_custom_call.1} parent=1 // pred_check_branch
      %44 = sbr.rel (0) target = $region25
    $region24: #{tpu_custom_call.1} parent=1 // pred_region
      _
    $region25: #{tpu_custom_call.1} parent=1 // pred_fallthru
      _
    // Predicated region
    $region26: #{tpu_custom_call.1} parent=1 // pred_check
      _
    $region27: #{tpu_custom_call.1} parent=1 // pred_check_branch
      %46 = sbr.rel (0) target = $region29
    $region28: #{tpu_custom_call.1} parent=1 // pred_region
      %47 = dma.done [#allocation3], 1024
    $region29: #{tpu_custom_call.1} parent=1 // pred_fallthru
      _
    // Predicated region
    $region30: #{tpu_custom_call.1} parent=1 // pred_check
      _
    $region31: #{tpu_custom_call.1} parent=1 // pred_check_branch
      %49 = sbr.rel (0) target = $region33
    $region32: #{tpu_custom_call.1} parent=1 // pred_region
      %50 = dma.done [#allocation5], 3072
    $region33: #{tpu_custom_call.1} parent=1 // pred_fallthru
      _
    %v51 = vld [vmem:[%s1] sm:$0xff]
    %v52 = vld [vmem:[%s0] sm:$0xff]
    %v53 = vld [vmem:[#allocation2] sm:$0xff]
    %v54 = vld [vmem:[#allocation2 + $0x8] sm:$0xff]
    %v55 = vld [vmem:[#allocation2 + $0x10] sm:$0xff]
    %v56 = vld [vmem:[#allocation2 + $0x18] sm:$0xff]
    %v57 = vld [vmem:[#allocation2 + $0x20] sm:$0xff]
    %v58 = vld [vmem:[#allocation2 + $0x28] sm:$0xff]
    %v59 = vld [vmem:[#allocation2 + $0x30] sm:$0xff]
    %v60 = vld [vmem:[#allocation2 + $0x38] sm:$0xff]
    %v61 = vld [vmem:[%s3] sm:$0x3]
    %v63 = vlaneseq
    %v64 = vshrl.u32 %v63, 7
    %v65 = vsub.s32 0, %v64
    %v66 = vrot.slane %v61, %v65
    %v67 = vlaneseq
    %v68 = vshrl.u32 %v67, 7
    %v69 = vsub.s32 1, %v68
    %v70 = vrot.slane %v61, %v69
    %vm73 = vcmask 261120
    %v75 = vsel %vm73, %v51, 0
    %77 = vmatprep.subr.mxu0 %v54
    %78 = vmatpush1.msra.mxu0 %v53
    %79 = vmatprep.subr.mxu0 %v56
    %80 = vmatpush1.msra.mxu0 %v55
    %81 = vmatprep.subr.mxu0 %v58
    %82 = vmatpush1.msra.mxu0 %v57
    %83 = vmatprep.subr.mxu0 %v60
    %84 = vmatpush1.msra.mxu0 %v59
    %85 = vmatprep.subr.mxu0 0.0
    %86 = vmatpush1.msra.mxu0 0.0
    %87 = vmatprep.subr.mxu0 0.0
    %88 = vmatpush1.msra.mxu0 0.0
    %89 = vmatprep.subr.mxu0 0.0
    %90 = vmatpush1.msra.mxu0 0.0
    %91 = vmatprep.subr.mxu0 0.0
    %92 = vmatpush1.msra.mxu0 0.0
    %93 = vmatprep.subr.mxu0 0.0
    %94 = vmatpush1.msra.mxu0 0.0
    %95 = vmatprep.subr.mxu0 0.0
    %96 = vmatpush1.msra.mxu0 0.0
    %97 = vmatprep.subr.mxu0 0.0
    %98 = vmatpush1.msra.mxu0 0.0
    %99 = vmatprep.subr.mxu0 0.0
    %100 = vmatpush1.msra.mxu0 0.0
    %101 = vmatprep.subr.mxu0 0.0
    %102 = vmatpush1.msra.mxu0 0.0
    %103 = vmatprep.subr.mxu0 0.0
    %104 = vmatpush1.msra.mxu0 0.0
    %105 = vmatprep.subr.mxu0 0.0
    %106 = vmatpush1.msra.mxu0 0.0
    %107 = vmatprep.subr.mxu0 0.0
    %108 = vmatpush1.msra.mxu0 0.0
    %109 = vmatprep.subr.mxu0 0.0
    %110 = vmatpush1.msra.mxu0 0.0
    %111 = vmatprep.subr.mxu0 0.0
    %112 = vmatpush1.msra.mxu0 0.0
    %113 = vmatprep.subr.mxu0 0.0
    %114 = vmatpush1.msra.mxu0 0.0
    %115 = vmatprep.subr.mxu0 0.0
    %116 = vmatpush1.msra.mxu0 0.0
    %117 = vmatprep.subr.mxu0 0.0
    %118 = vmatpush1.msra.mxu0 0.0
    %119 = vmatprep.subr.mxu0 0.0
    %120 = vmatpush1.msra.mxu0 0.0
    %121 = vmatprep.subr.mxu0 0.0
    %122 = vmatpush1.msra.mxu0 0.0
    %123 = vmatprep.subr.mxu0 0.0
    %124 = vmatpush1.msra.mxu0 0.0
    %125 = vmatprep.subr.mxu0 0.0
    %126 = vmatpush1.msra.mxu0 0.0
    %127 = vmatprep.subr.mxu0 0.0
    %128 = vmatpush1.msra.mxu0 0.0
    %129 = vmatprep.subr.mxu0 0.0
    %130 = vmatpush1.msra.mxu0 0.0
    %131 = vmatprep.subr.mxu0 0.0
    %132 = vmatpush1.msra.mxu0 0.0
    %133 = vmatprep.subr.mxu0 0.0
    %134 = vmatpush1.msra.mxu0 0.0
    %135 = vmatprep.subr.mxu0 0.0
    %136 = vmatpush1.msra.mxu0 0.0
    %137 = vmatprep.subr.mxu0 0.0
    %138 = vmatpush1.msra.mxu0 0.0
    %139 = vmatprep.subr.mxu0 0.0
    %140 = vmatpush1.msra.mxu0 0.0
    %141 = vmatprep.mubr.f32.mxu0 0.0
    %142 = vmatmul.mubr.f32.gmra.mrb[0].mxu0 %v75
    %v143 = vpop.f32.mrb[0].mxu0
    %v144 = vadd.f32 %v66, %v143
    %v145 = vpop.f32.mrb[0].mxu0
    %v146 = vadd.f32 %v70, %v145
    %147 = vdwg.mxu0
    %v148 = vmax.f32 %v144, 0.0
    %v149 = vmax.f32 %v146, 0.0
    %v150 = vld [vmem:[#allocation4] sm:$0xff]
    %v151 = vld [vmem:[#allocation4 + $0x8] sm:$0xff]
    %v152 = vld [vmem:[#allocation4 + $0x18] sm:$0xff]
    %v153 = vld [vmem:[#allocation4 + $0x20] sm:$0xff]
    %v154 = vld [vmem:[#allocation4 + $0x30] sm:$0xff]
    %v155 = vld [vmem:[#allocation4 + $0x38] sm:$0xff]
    %v156 = vld [vmem:[#allocation4 + $0x48] sm:$0xff]
    %v157 = vld [vmem:[#allocation4 + $0x50] sm:$0xff]
    %v158 = vld [vmem:[#allocation4 + $0x60] sm:$0xff]
    %v159 = vld [vmem:[#allocation4 + $0x68] sm:$0xff]
    %v160 = vld [vmem:[#allocation4 + $0x78] sm:$0xff]
    %v161 = vld [vmem:[#allocation4 + $0x80] sm:$0xff]
    %v162 = vld [vmem:[#allocation4 + $0x90] sm:$0xff]
    %v163 = vld [vmem:[#allocation4 + $0x98] sm:$0xff]
    %v164 = vld [vmem:[#allocation4 + $0xa8] sm:$0xff]
    %v165 = vld [vmem:[#allocation4 + $0xb0] sm:$0xff]
    %v166 = vld [vmem:[%s5] sm:$0x3]
    %v168 = vlaneseq
    %v169 = vshrl.u32 %v168, 7
    %v170 = vsub.s32 0, %v169
    %v171 = vrot.slane %v166, %v170
    %v172 = vlaneseq
    %v173 = vshrl.u32 %v172, 7
    %v174 = vsub.s32 1, %v173
    %v175 = vrot.slane %v166, %v174
    %vm178 = vcmask 523264
    %v180 = vsel %vm178, %v148, 0
    %182 = vmatprep.subr.mxu0 %v151
    %183 = vmatpush1.msra.mxu0 %v150
    %184 = vmatprep.subr.mxu0 %v153
    %185 = vmatpush1.msra.mxu0 %v152
    %186 = vmatprep.subr.mxu0 %v155
    %187 = vmatpush1.msra.mxu0 %v154
    %188 = vmatprep.subr.mxu0 %v157
    %189 = vmatpush1.msra.mxu0 %v156
    %190 = vmatprep.subr.mxu0 %v159
    %191 = vmatpush1.msra.mxu0 %v158
    %192 = vmatprep.subr.mxu0 %v161
    %193 = vmatpush1.msra.mxu0 %v160
    %194 = vmatprep.subr.mxu0 %v163
    %195 = vmatpush1.msra.mxu0 %v162
    %196 = vmatprep.subr.mxu0 %v165
    %197 = vmatpush1.msra.mxu0 %v164
    %198 = vmatprep.subr.mxu0 0.0
    %199 = vmatpush1.msra.mxu0 0.0
    %200 = vmatprep.subr.mxu0 0.0
    %201 = vmatpush1.msra.mxu0 0.0
    %202 = vmatprep.subr.mxu0 0.0
    %203 = vmatpush1.msra.mxu0 0.0
    %204 = vmatprep.subr.mxu0 0.0
    %205 = vmatpush1.msra.mxu0 0.0
    %206 = vmatprep.subr.mxu0 0.0
    %207 = vmatpush1.msra.mxu0 0.0
    %208 = vmatprep.subr.mxu0 0.0
    %209 = vmatpush1.msra.mxu0 0.0
    %210 = vmatprep.subr.mxu0 0.0
    %211 = vmatpush1.msra.mxu0 0.0
    %212 = vmatprep.subr.mxu0 0.0
    %213 = vmatpush1.msra.mxu0 0.0
    %214 = vmatprep.subr.mxu0 0.0
    %215 = vmatpush1.msra.mxu0 0.0
    %216 = vmatprep.subr.mxu0 0.0
    %217 = vmatpush1.msra.mxu0 0.0
    %218 = vmatprep.subr.mxu0 0.0
    %219 = vmatpush1.msra.mxu0 0.0
    %220 = vmatprep.subr.mxu0 0.0
    %221 = vmatpush1.msra.mxu0 0.0
    %222 = vmatprep.subr.mxu0 0.0
    %223 = vmatpush1.msra.mxu0 0.0
    %224 = vmatprep.subr.mxu0 0.0
    %225 = vmatpush1.msra.mxu0 0.0
    %226 = vmatprep.subr.mxu0 0.0
    %227 = vmatpush1.msra.mxu0 0.0
    %228 = vmatprep.subr.mxu0 0.0
    %229 = vmatpush1.msra.mxu0 0.0
    %230 = vmatprep.subr.mxu0 0.0
    %231 = vmatpush1.msra.mxu0 0.0
    %232 = vmatprep.subr.mxu0 0.0
    %233 = vmatpush1.msra.mxu0 0.0
    %234 = vmatprep.subr.mxu0 0.0
    %235 = vmatpush1.msra.mxu0 0.0
    %236 = vmatprep.subr.mxu0 0.0
    %237 = vmatpush1.msra.mxu0 0.0
    %238 = vmatprep.subr.mxu0 0.0
    %239 = vmatpush1.msra.mxu0 0.0
    %240 = vmatprep.subr.mxu0 0.0
    %241 = vmatpush1.msra.mxu0 0.0
    %242 = vmatprep.subr.mxu0 0.0
    %243 = vmatpush1.msra.mxu0 0.0
    %244 = vmatprep.subr.mxu0 0.0
    %245 = vmatpush1.msra.mxu0 0.0
    %246 = vmatprep.mubr.f32.mxu0 0.0
    %247 = vmatmul.mubr.f32.gmra.mrb[0].mxu0 %v180
    %v248 = vpop.f32.mrb[0].mxu0
    %v249 = vadd.f32 %v171, %v248
    %v250 = vpop.f32.mrb[0].mxu0
    %v251 = vadd.f32 %v175, %v250
    %252 = vdwg.mxu0
    %v253 = vand.u32 2147483647, %v249
    %v254 = vand.u32 2147483647, %v251
    %v255 = vld [vmem:[#allocation4 + $0x10] sm:$0xff]
    %v256 = vld [vmem:[#allocation4 + $0x28] sm:$0xff]
    %v257 = vld [vmem:[#allocation4 + $0x40] sm:$0xff]
    %v258 = vld [vmem:[#allocation4 + $0x58] sm:$0xff]
    %v259 = vld [vmem:[#allocation4 + $0x70] sm:$0xff]
    %v260 = vld [vmem:[#allocation4 + $0x88] sm:$0xff]
    %v261 = vld [vmem:[#allocation4 + $0xa0] sm:$0xff]
    %v262 = vld [vmem:[#allocation4 + $0xb8] sm:$0xff]
    %v263 = vld [vmem:[%s5 + $0x2] sm:$0x1]
    %v265 = vlaneseq
    %v266 = vshrl.u32 %v265, 7
    %v267 = vsub.s32 0, %v266
    %v268 = vrot.slane %v263, %v267
    %270 = vrot.lane.b32.xlu0 %v148, 64
    %v271 = vpop.permute.xlu0 %270
    %v272 = vsel %vm178, %v271, 0
    %274 = vmatprep.subr.mxu0 0.0
    %275 = vmatpush1.msra.mxu0 %v255
    %276 = vmatprep.subr.mxu0 0.0
    %277 = vmatpush1.msra.mxu0 %v256
    %278 = vmatprep.subr.mxu0 0.0
    %279 = vmatpush1.msra.mxu0 %v257
    %280 = vmatprep.subr.mxu0 0.0
    %281 = vmatpush1.msra.mxu0 %v258
    %282 = vmatprep.subr.mxu0 0.0
    %283 = vmatpush1.msra.mxu0 %v259
    %284 = vmatprep.subr.mxu0 0.0
    %285 = vmatpush1.msra.mxu0 %v260
    %286 = vmatprep.subr.mxu0 0.0
    %287 = vmatpush1.msra.mxu0 %v261
    %288 = vmatprep.subr.mxu0 0.0
    %289 = vmatpush1.msra.mxu0 %v262
    %290 = vmatprep.subr.mxu0 0.0
    %291 = vmatpush1.msra.mxu0 0.0
    %292 = vmatprep.subr.mxu0 0.0
    %293 = vmatpush1.msra.mxu0 0.0
    %294 = vmatprep.subr.mxu0 0.0
    %295 = vmatpush1.msra.mxu0 0.0
    %296 = vmatprep.subr.mxu0 0.0
    %297 = vmatpush1.msra.mxu0 0.0
    %298 = vmatprep.subr.mxu0 0.0
    %299 = vmatpush1.msra.mxu0 0.0
    %300 = vmatprep.subr.mxu0 0.0
    %301 = vmatpush1.msra.mxu0 0.0
    %302 = vmatprep.subr.mxu0 0.0
    %303 = vmatpush1.msra.mxu0 0.0
    %304 = vmatprep.subr.mxu0 0.0
    %305 = vmatpush1.msra.mxu0 0.0
    %306 = vmatprep.subr.mxu0 0.0
    %307 = vmatpush1.msra.mxu0 0.0
    %308 = vmatprep.subr.mxu0 0.0
    %309 = vmatpush1.msra.mxu0 0.0
    %310 = vmatprep.subr.mxu0 0.0
    %311 = vmatpush1.msra.mxu0 0.0
    %312 = vmatprep.subr.mxu0 0.0
    %313 = vmatpush1.msra.mxu0 0.0
    %314 = vmatprep.subr.mxu0 0.0
    %315 = vmatpush1.msra.mxu0 0.0
    %316 = vmatprep.subr.mxu0 0.0
    %317 = vmatpush1.msra.mxu0 0.0
    %318 = vmatprep.subr.mxu0 0.0
    %319 = vmatpush1.msra.mxu0 0.0
    %320 = vmatprep.subr.mxu0 0.0
    %321 = vmatpush1.msra.mxu0 0.0
    %322 = vmatprep.subr.mxu0 0.0
    %323 = vmatpush1.msra.mxu0 0.0
    %324 = vmatprep.subr.mxu0 0.0
    %325 = vmatpush1.msra.mxu0 0.0
    %326 = vmatprep.subr.mxu0 0.0
    %327 = vmatpush1.msra.mxu0 0.0
    %328 = vmatprep.subr.mxu0 0.0
    %329 = vmatpush1.msra.mxu0 0.0
    %330 = vmatprep.subr.mxu0 0.0
    %331 = vmatpush1.msra.mxu0 0.0
    %332 = vmatprep.subr.mxu0 0.0
    %333 = vmatpush1.msra.mxu0 0.0
    %334 = vmatprep.subr.mxu0 0.0
    %335 = vmatpush1.msra.mxu0 0.0
    %336 = vmatprep.subr.mxu0 0.0
    %337 = vmatpush1.msra.mxu0 0.0
    %338 = vmatprep.mubr.f32.mxu0 0.0
    %339 = vmatmul.mubr.f32.gmra.mrb[0].mxu0 %v272
    %v340 = vpop.f32.mrb[0].mxu0
    %v341 = vadd.f32 %v268, %v340
    %v342 = vpop.f32.mrb[0].mxu0
    %343 = vdwg.mxu0
    %v344 = vand.u32 2147483647, %v341
    %353 = vrot.lane.b32.xlu0 %v255, 64
    %v354 = vpop.permute.xlu0 %353
    %355 = vrot.lane.b32.xlu0 %v256, 64
    %v356 = vpop.permute.xlu0 %355
    %357 = vrot.lane.b32.xlu0 %v257, 64
    %v358 = vpop.permute.xlu0 %357
    %359 = vrot.lane.b32.xlu0 %v258, 64
    %v360 = vpop.permute.xlu0 %359
    %361 = vrot.lane.b32.xlu0 %v259, 64
    %v362 = vpop.permute.xlu0 %361
    %363 = vrot.lane.b32.xlu0 %v260, 64
    %v364 = vpop.permute.xlu0 %363
    %365 = vrot.lane.b32.xlu0 %v261, 64
    %v366 = vpop.permute.xlu0 %365
    %367 = vrot.lane.b32.xlu0 %v262, 64
    %v368 = vpop.permute.xlu0 %367
    %377 = vrot.lane.b32.xlu0 %v268, 64
    %v378 = vpop.permute.xlu0 %377
    %v381 = vsel %vm178, %v149, 0
    %383 = vmatprep.subr.mxu0 0.0
    %384 = vmatpush1.msra.mxu0 %v354
    %385 = vmatprep.subr.mxu0 0.0
    %386 = vmatpush1.msra.mxu0 %v356
    %387 = vmatprep.subr.mxu0 0.0
    %388 = vmatpush1.msra.mxu0 %v358
    %389 = vmatprep.subr.mxu0 0.0
    %390 = vmatpush1.msra.mxu0 %v360
    %391 = vmatprep.subr.mxu0 0.0
    %392 = vmatpush1.msra.mxu0 %v362
    %393 = vmatprep.subr.mxu0 0.0
    %394 = vmatpush1.msra.mxu0 %v364
    %395 = vmatprep.subr.mxu0 0.0
    %396 = vmatpush1.msra.mxu0 %v366
    %397 = vmatprep.subr.mxu0 0.0
    %398 = vmatpush1.msra.mxu0 %v368
    %399 = vmatprep.subr.mxu0 0.0
    %400 = vmatpush1.msra.mxu0 0.0
    %401 = vmatprep.subr.mxu0 0.0
    %402 = vmatpush1.msra.mxu0 0.0
    %403 = vmatprep.subr.mxu0 0.0
    %404 = vmatpush1.msra.mxu0 0.0
    %405 = vmatprep.subr.mxu0 0.0
    %406 = vmatpush1.msra.mxu0 0.0
    %407 = vmatprep.subr.mxu0 0.0
    %408 = vmatpush1.msra.mxu0 0.0
    %409 = vmatprep.subr.mxu0 0.0
    %410 = vmatpush1.msra.mxu0 0.0
    %411 = vmatprep.subr.mxu0 0.0
    %412 = vmatpush1.msra.mxu0 0.0
    %413 = vmatprep.subr.mxu0 0.0
    %414 = vmatpush1.msra.mxu0 0.0
    %415 = vmatprep.subr.mxu0 0.0
    %416 = vmatpush1.msra.mxu0 0.0
    %417 = vmatprep.subr.mxu0 0.0
    %418 = vmatpush1.msra.mxu0 0.0
    %419 = vmatprep.subr.mxu0 0.0
    %420 = vmatpush1.msra.mxu0 0.0
    %421 = vmatprep.subr.mxu0 0.0
    %422 = vmatpush1.msra.mxu0 0.0
    %423 = vmatprep.subr.mxu0 0.0
    %424 = vmatpush1.msra.mxu0 0.0
    %425 = vmatprep.subr.mxu0 0.0
    %426 = vmatpush1.msra.mxu0 0.0
    %427 = vmatprep.subr.mxu0 0.0
    %428 = vmatpush1.msra.mxu0 0.0
    %429 = vmatprep.subr.mxu0 0.0
    %430 = vmatpush1.msra.mxu0 0.0
    %431 = vmatprep.subr.mxu0 0.0
    %432 = vmatpush1.msra.mxu0 0.0
    %433 = vmatprep.subr.mxu0 0.0
    %434 = vmatpush1.msra.mxu0 0.0
    %435 = vmatprep.subr.mxu0 0.0
    %436 = vmatpush1.msra.mxu0 0.0
    %437 = vmatprep.subr.mxu0 0.0
    %438 = vmatpush1.msra.mxu0 0.0
    %439 = vmatprep.subr.mxu0 0.0
    %440 = vmatpush1.msra.mxu0 0.0
    %441 = vmatprep.subr.mxu0 0.0
    %442 = vmatpush1.msra.mxu0 0.0
    %443 = vmatprep.subr.mxu0 0.0
    %444 = vmatpush1.msra.mxu0 0.0
    %445 = vmatprep.subr.mxu0 0.0
    %446 = vmatpush1.msra.mxu0 0.0
    %447 = vmatprep.mubr.f32.mxu0 0.0
    %448 = vmatmul.mubr.f32.gmra.mrb[0].mxu0 %v381
    %v449 = vpop.f32.mrb[0].mxu0
    %v450 = vadd.f32 %v378, %v449
    %v451 = vpop.f32.mrb[0].mxu0
    %452 = vdwg.mxu0
    %v453 = vld [vmem:[%s5 + $0x3] sm:$0x1]
    %v455 = vlaneseq
    %v456 = vshrl.u32 %v455, 7
    %v457 = vsub.s32 0, %v456
    %v458 = vrot.slane %v453, %v457
    %459 = vrot.lane.b32.xlu0 %v458, 64
    %v460 = vpop.permute.xlu0 %459
    %v462 = vmul.f32 %v149, %v460
    %464 = vrot.lane.b32.xlu0 %v462, 64
    %v465 = vpop.permute.xlu0 %464
    %v467 = vsel %vm178, %v465, 0.0
    %468 = vadd.xlane.f32.xlu0 %v467
    %v469 = vpop.xlane.xlu0 %468
    %v471 = vadd.f32 %v469, %v458
    %473 = vset.pattern.permute.xlu0 0
    %474 = vperm.xlu0 %473, %v52
    %v475 = vpop.permute.xlu0 %474
    %v477 = vmul.f32 %v475, %v253
    %v478 = vadd.f32 %v450, %v477
    %479 = vset.pattern.permute.xlu0 1
    %480 = vperm.xlu0 %479, %v52
    %v481 = vpop.permute.xlu0 %480
    %v483 = vmul.f32 %v481, %v253
    %485 = vrot.lane.b32.xlu0 %v483, 64
    %v486 = vpop.permute.xlu0 %485
    %v488 = vadd.f32 %v478, %v486
    %489 = vset.pattern.permute.xlu0 2
    %490 = vperm.xlu0 %489, %v52
    %v491 = vpop.permute.xlu0 %490
    %v493 = vmul.f32 %v491, %v254
    %v494 = vadd.f32 %v488, %v493
    %495 = vset.pattern.permute.xlu0 3
    %496 = vperm.xlu0 %495, %v52
    %v497 = vpop.permute.xlu0 %496
    %v499 = vmul.f32 %v497, %v254
    %501 = vrot.lane.b32.xlu0 %v499, 64
    %v502 = vpop.permute.xlu0 %501
    %v504 = vadd.f32 %v494, %v502
    %v505 = vmul.f32 %v504, %v344
    %v506 = vsel %vm178, %v505, 0.0
    %507 = vadd.xlane.f32.xlu0 %v506
    %v508 = vpop.xlane.xlu0 %507
    %v509 = vadd.f32 %v508, %v471
    %511 = vrot.lane.b32.xlu0 %v509, 64
    %v512 = vpop.permute.xlu0 %511
    %vm514 = vcmask 7168
    %515 = vst.msk [vmem:[%s6] sm:$0xff] %vm514, %v512
    // Predicated region
    $region34: #{tpu_custom_call.1} parent=1 // pred_check
      _
    $region35: #{tpu_custom_call.1} parent=1 // pred_check_branch
      %517 = sbr.rel (0) target = $region37
    $region36: #{tpu_custom_call.1} parent=1 // pred_region
      _
    $region37: #{tpu_custom_call.1} parent=1 // pred_fallthru
      _
    // Predicated region
    $region38: #{tpu_custom_call.1} parent=1 // pred_check
      _
    $region39: #{tpu_custom_call.1} parent=1 // pred_check_branch
      %519 = sbr.rel (0) target = $region41
    $region40: #{tpu_custom_call.1} parent=1 // pred_region
      _
    $region41: #{tpu_custom_call.1} parent=1 // pred_fallthru
      _
    %520 = vsyncpa [#allocation3], 1
    %521 = vsyncpa [#allocation5], 1

</llo_original>
